<compile_context>
chip_gen: v6e
topology: v6e:2x2x1
jax: 0.10.0
libtpu: 0.0.40
codegen_flags: <defaults>
</compile_context>

<pallas_src>
import jax
import jax.numpy as jnp
from jax.experimental import pallas as pl
from jax.experimental.pallas import tpu as pltpu


def waver_kernel(x_ref, c_ref, w1t_ref, b1_ref, w2t_ref, b2_ref, o_ref):
    # x_ref:   (zGL, TP)   streamed pixel tile, channels-first
    # c_ref:   (2P,  TP)
    # w1t_ref: (Kp,  zGL)  b1_ref: (Kp, 1)
    # w2t_ref: (2P,  Kp)   b2_ref: (2P, 1)   (= 5*b2 + waveNumbers, folded)
    # o_ref:   (2P,  TP)
    h = jnp.dot(w1t_ref[...], x_ref[...], preferred_element_type=jnp.float32)
    h = jnp.maximum(h + b1_ref[...], 0.0)                       # ReLU(True)
    y = jnp.dot(w2t_ref[...], h, preferred_element_type=jnp.float32)
    o_ref[...] = (y + b2_ref[...]) * c_ref[...]


def waver_forward(GLZ_nchw, c_nchw, w1, b1, w2, b2, wave_numbers, *,
                  tile_p=2048, k_pad_to=64):
    """GLZ_nchw: (N, zGL, H, W); c_nchw: (N, 2*zPeriodic, H, W).
    Returns (N, 2*zPeriodic, H, W) float32."""
    N, zGL, H, W = GLZ_nchw.shape
    two_p = c_nchw.shape[1]
    K = w1.shape[1]
    P = N * H * W

    # --- fold constants & zero-pad hidden width to a sublane-aligned size ---
    Kp = max(k_pad_to, ((K + 7) // 8) * 8)
    w1_p = jnp.zeros((zGL, Kp), jnp.float32).at[:, :K].set(w1)
    b1_p = jnp.zeros((Kp,), jnp.float32).at[:K].set(b1)
    w2_p = jnp.zeros((Kp, two_p), jnp.float32).at[:K, :].set(5.0 * w2)
    b2_f = (5.0 * b2 + wave_numbers).astype(jnp.float32)

    w1_t = w1_p.T                       # (Kp, zGL)
    b1_2d = b1_p.reshape(Kp, 1)         # (Kp, 1)
    w2_t = w2_p.T                       # (two_p, Kp)
    b2_2d = b2_f.reshape(two_p, 1)      # (two_p, 1)

    # --- channels-first flatten: NCHW -> (C, N*H*W) -------------------------
    x_flat = jnp.transpose(GLZ_nchw, (1, 0, 2, 3)).reshape(zGL, P)
    c_flat = jnp.transpose(c_nchw, (1, 0, 2, 3)).reshape(two_p, P)

    # --- pixel tiling: lane-dense tiles, >= 2 grid steps when possible ------
    tile_p = max(128, (tile_p // 128) * 128)
    if P > 128:
        half = pl.cdiv(pl.cdiv(P, 2), 128) * 128   # keep >=2 steps (v7x: 2 TCs)
        tile_p = min(tile_p, half)
    n_tiles = pl.cdiv(P, tile_p)
    P_pad = n_tiles * tile_p
    if P_pad != P:
        x_flat = jnp.pad(x_flat, ((0, 0), (0, P_pad - P)))
        c_flat = jnp.pad(c_flat, ((0, 0), (0, P_pad - P)))

    out_flat = pl.pallas_call(
        waver_kernel,
        out_shape=jax.ShapeDtypeStruct((two_p, P_pad), jnp.float32),
        grid_spec=pltpu.PrefetchScalarGridSpec(
            num_scalar_prefetch=0,
            grid=(n_tiles,),
            in_specs=[
                pl.BlockSpec((zGL, tile_p), lambda i: (0, i)),    # GLZ pixels
                pl.BlockSpec((two_p, tile_p), lambda i: (0, i)),  # c pixels
                pl.BlockSpec((Kp, zGL), lambda i: (0, 0)),        # w1^T (full)
                pl.BlockSpec((Kp, 1), lambda i: (0, 0)),          # b1
                pl.BlockSpec((two_p, Kp), lambda i: (0, 0)),      # 5*w2^T
                pl.BlockSpec((two_p, 1), lambda i: (0, 0)),       # 5*b2 + wn
            ],
            out_specs=pl.BlockSpec((two_p, tile_p), lambda i: (0, i)),
        ),
        compiler_params=pltpu.CompilerParams(
            dimension_semantics=("parallel",)),
    )(x_flat, c_flat, w1_t, b1_2d, w2_t, b2_2d)

    out_flat = out_flat[:, :P]
    # (two_p, P) -> (two_p, N, H, W) -> NCHW
    return jnp.transpose(out_flat.reshape(two_p, N, H, W), (1, 0, 2, 3))


def reference_forward(GLZ, c, w1, b1, w2, b2, wave_numbers):
    """Pure-JAX reference mirroring the PyTorch NCHW 1x1-conv path."""
    N, zGL, H, W = GLZ.shape
    x = jnp.transpose(GLZ, (0, 2, 3, 1)).reshape(-1, zGL)
    h = jnp.maximum(x @ w1 + b1, 0.0)
    y = h @ w2 + b2
    y_nchw = jnp.transpose(y.reshape(N, H, W, -1), (0, 3, 1, 2))
    return (wave_numbers.reshape(1, -1, 1, 1) + 5.0 * y_nchw) * c


if __name__ == "__main__":
    # Module hyperparameters (small, consistent with the forward pass).
    zGL = 4          # "noise channels, identical on every spatial position"
    zPeriodic = 3    # "periodic spatial waves"  -> 2*zPeriodic = 6 output chans
    K = 50           # hidden width of the 1x1-conv MLP
    N, H, Wsp = 2, 16, 16

    key = jax.random.PRNGKey(0)
    k_glz, k_c, k_w1, k_b1, k_w2, k_b2, k_wn = jax.random.split(key, 7)

    # Deterministic synthetic parameters (Conv2d(.., 1) weights flattened to
    # matmul form: PyTorch weight (Cout, Cin, 1, 1) -> here (Cin, Cout)).
    w1 = jax.random.normal(k_w1, (zGL, K), jnp.float32) * 0.1
    b1 = jax.random.normal(k_b1, (K,), jnp.float32) * 0.1
    w2 = jax.random.normal(k_w2, (K, 2 * zPeriodic), jnp.float32) * 0.1
    b2 = jax.random.normal(k_b2, (2 * zPeriodic,), jnp.float32) * 0.1
    # Fixed global waveNumbers constant, shape (1, 2*zPeriodic, 1, 1) broadcast.
    wave_numbers = jax.random.uniform(
        k_wn, (2 * zPeriodic,), jnp.float32, minval=-1.0, maxval=1.0)

    # TODO(synk): zGL == 0 branch (learnedWN as a learned constant, trivial
    # broadcast elementwise) is not routed through the Pallas kernel.

    # Inputs: GLZ noise (NCHW) and coordinate field c (NCHW).
    GLZ = jax.random.normal(k_glz, (N, zGL, H, Wsp), jnp.float32)
    c = jax.random.normal(k_c, (N, 2 * zPeriodic, H, Wsp), jnp.float32)

    out = waver_forward(GLZ, c, w1, b1, w2, b2, wave_numbers)
    out = jax.block_until_ready(out)

    ref = reference_forward(GLZ, c, w1, b1, w2, b2, wave_numbers)
    assert out.shape == (N, 2 * zPeriodic, H, Wsp)
    assert jnp.allclose(out, ref, atol=1e-5, rtol=1e-5), "mismatch vs reference"

    print("KERNEL_OK")
</pallas_src>

<mosaic_0001>
module attributes {stable_mosaic.version = 11 : i64} {
  func.func @waver_kernel(%arg0: i32, %arg1: memref<4x256xf32, #tpu.memory_space<vmem>>, %arg2: memref<6x256xf32, #tpu.memory_space<vmem>>, %arg3: memref<64x4xf32, #tpu.memory_space<vmem>>, %arg4: memref<64x1xf32, #tpu.memory_space<vmem>>, %arg5: memref<6x64xf32, #tpu.memory_space<vmem>>, %arg6: memref<6x1xf32, #tpu.memory_space<vmem>>, %arg7: memref<6x256xf32, #tpu.memory_space<vmem>>) attributes {dimension_semantics = [#tpu.dimension_semantics<parallel>], iteration_bounds = array<i64: 2>, scalar_prefetch = 0 : i64, scratch_operands = 0 : i64, tpu.core_type = #tpu.core_type<tc>, window_params = [{transform_indices = @transform_0, window_bounds = array<i64: 4, 256>}, {transform_indices = @transform_1, window_bounds = array<i64: 6, 256>}, {pipeline_mode = #tpu.pipeline_mode<synchronous>, transform_indices = @transform_2, window_bounds = array<i64: 64, 4>}, {pipeline_mode = #tpu.pipeline_mode<synchronous>, transform_indices = @transform_3, window_bounds = array<i64: 64, 1>}, {pipeline_mode = #tpu.pipeline_mode<synchronous>, transform_indices = @transform_4, window_bounds = array<i64: 6, 64>}, {pipeline_mode = #tpu.pipeline_mode<synchronous>, transform_indices = @transform_5, window_bounds = array<i64: 6, 1>}, {transform_indices = @transform_6, window_bounds = array<i64: 6, 256>}]} {
    %c0 = arith.constant 0 : index
    %c0_0 = arith.constant 0 : index
    %0 = vector.load %arg3[%c0, %c0_0] : memref<64x4xf32, #tpu.memory_space<vmem>>, vector<64x4xf32>
    %c0_1 = arith.constant 0 : index
    %c0_2 = arith.constant 0 : index
    %1 = vector.load %arg1[%c0_1, %c0_2] : memref<4x256xf32, #tpu.memory_space<vmem>>, vector<4x256xf32>
    %cst = arith.constant dense<0.000000e+00> : vector<64x256xf32>
    %2 = tpu.matmul %0, %1, %cst {dimension_numbers = #tpu.dot_dimension_numbers<[1], [0], [0], [1], [0, 0, 1, 1], [], []>} : vector<64x4xf32>, vector<4x256xf32>, vector<64x256xf32> -> vector<64x256xf32>
    %c0_3 = arith.constant 0 : index
    %c0_4 = arith.constant 0 : index
    %3 = vector.load %arg4[%c0_3, %c0_4] : memref<64x1xf32, #tpu.memory_space<vmem>>, vector<64x1xf32>
    %4 = vector.broadcast %3 : vector<64x1xf32> to vector<64x256xf32>
    %5 = arith.addf %2, %4 : vector<64x256xf32>
    %cst_5 = arith.constant 0.000000e+00 : f32
    %6 = vector.broadcast %cst_5 : f32 to vector<64x256xf32>
    %7 = arith.maximumf %5, %6 : vector<64x256xf32>
    %c0_6 = arith.constant 0 : index
    %c0_7 = arith.constant 0 : index
    %8 = vector.load %arg5[%c0_6, %c0_7] : memref<6x64xf32, #tpu.memory_space<vmem>>, vector<6x64xf32>
    %cst_8 = arith.constant dense<0.000000e+00> : vector<6x256xf32>
    %9 = tpu.matmul %8, %7, %cst_8 {dimension_numbers = #tpu.dot_dimension_numbers<[1], [0], [0], [1], [0, 0, 1, 1], [], []>} : vector<6x64xf32>, vector<64x256xf32>, vector<6x256xf32> -> vector<6x256xf32>
    %c0_9 = arith.constant 0 : index
    %c0_10 = arith.constant 0 : index
    %10 = vector.load %arg6[%c0_9, %c0_10] : memref<6x1xf32, #tpu.memory_space<vmem>>, vector<6x1xf32>
    %11 = vector.broadcast %10 : vector<6x1xf32> to vector<6x256xf32>
    %12 = arith.addf %9, %11 : vector<6x256xf32>
    %c0_11 = arith.constant 0 : index
    %c0_12 = arith.constant 0 : index
    %13 = vector.load %arg2[%c0_11, %c0_12] : memref<6x256xf32, #tpu.memory_space<vmem>>, vector<6x256xf32>
    %14 = arith.mulf %12, %13 : vector<6x256xf32>
    %c0_13 = arith.constant 0 : index
    %c0_14 = arith.constant 0 : index
    %15 = vector.load %arg7[%c0_13, %c0_14] : memref<6x256xf32, #tpu.memory_space<vmem>>, vector<6x256xf32>
    tpu.vector_store %arg7[%c0_13, %c0_14], %14 {strides = array<i32>} : memref<6x256xf32, #tpu.memory_space<vmem>>, vector<6x256xf32>,
    return
  }
  func.func @transform_0(%arg0: i32) -> (i32, i32) {
    %c0_i32 = arith.constant 0 : i32
    %c0_i32_0 = arith.constant 0 : i32
    return %c0_i32, %arg0 : i32, i32
  }
  func.func @transform_1(%arg0: i32) -> (i32, i32) {
    %c0_i32 = arith.constant 0 : i32
    %c0_i32_0 = arith.constant 0 : i32
    return %c0_i32, %arg0 : i32, i32
  }
  func.func @transform_2(%arg0: i32) -> (i32, i32) {
    %c0_i32 = arith.constant 0 : i32
    %c0_i32_0 = arith.constant 0 : i32
    %c0_i32_1 = arith.constant 0 : i32
    return %c0_i32, %c0_i32_0 : i32, i32
  }
  func.func @transform_3(%arg0: i32) -> (i32, i32) {
    %c0_i32 = arith.constant 0 : i32
    %c0_i32_0 = arith.constant 0 : i32
    %c0_i32_1 = arith.constant 0 : i32
    return %c0_i32, %c0_i32_0 : i32, i32
  }
  func.func @transform_4(%arg0: i32) -> (i32, i32) {
    %c0_i32 = arith.constant 0 : i32
    %c0_i32_0 = arith.constant 0 : i32
    %c0_i32_1 = arith.constant 0 : i32
    return %c0_i32, %c0_i32_0 : i32, i32
  }
  func.func @transform_5(%arg0: i32) -> (i32, i32) {
    %c0_i32 = arith.constant 0 : i32
    %c0_i32_0 = arith.constant 0 : i32
    %c0_i32_1 = arith.constant 0 : i32
    return %c0_i32, %c0_i32_0 : i32, i32
  }
  func.func @transform_6(%arg0: i32) -> (i32, i32) {
    %c0_i32 = arith.constant 0 : i32
    %c0_i32_0 = arith.constant 0 : i32
    return %c0_i32, %arg0 : i32, i32
  }
}

</mosaic_0001>

<llo_original>
// kernel: tpu_custom_call.1
$region0: #{tpu_custom_call.1}
  #allocation0 [shape = 'u32[]', space=smem, size = 0x4, offset = 0x4, fixed_abs, tag = 'smem constant byte address 0x4 - core index']
  #allocation1 [shape = 'u32[144,128]{1,0:T(1,128)}', space=vmem, size = 0x12000, scoped, tag = 'internal scratch']
  %s0 = inlined_call_operand.vmem [shape: f32[4,512], index: 0, kind: input, shape index: {}]
  %s1 = inlined_call_operand.vmem [shape: f32[6,512], index: 1, kind: input, shape index: {}]
  %s2 = inlined_call_operand.vmem [shape: f32[64,4], index: 2, kind: input, shape index: {}]
  %s3 = inlined_call_operand.vmem [shape: f32[64,1], index: 3, kind: input, shape index: {}]
  %s4 = inlined_call_operand.vmem [shape: f32[6,64], index: 4, kind: input, shape index: {}]
  %s5 = inlined_call_operand.vmem [shape: f32[6,1], index: 5, kind: input, shape index: {}]
  %s6 = inlined_call_operand.hbm [shape: f32[6,512], index: 6, kind: output, shape index: {}]
  %s7 = sld [smem:[#allocation0]]
  $region57: #{tpu_custom_call.1} parent=0
    _
  %s9 = ssub.s32 1, %s7
  %s10 = scalar_select 0, %s9, %s7
  $region1: #{tpu_custom_call.1} parent=0
    #allocation2 [shape = 'u8[16384]{0}', space=vmem, size = 0x4000, scoped, tag = 'output window, operand 0']
    #allocation3 [shape = 's32[2]{0}', space=sflag, size = 0x8, scoped, tag = 'scoped memory for tpu_custom_call.1']
    %11 = vsyncpa [#allocation3], 0
    %s12 = scalar_lea.sflag [#allocation3], 1
    %13 = vsyncpa %s12, 0
    loop: start=0, step=1, limit=4
    $region2: #{tpu_custom_call.1} parent=1 // loop_pre_header
      _
    $region3: #{tpu_custom_call.1} parent=1 // loop_header
      %s15 = sphi 0, %s19
      %p16 = scmp.ge.s32.totalorder %s15, 4
      %s25 = sphi 0, %s27
      %s28 = sphi 0, %s25
      %s29 = sphi 0, %s28
      %s45 = sphi 0, %s29
      %s51 = sphi 0, %s53
      %s54 = sphi 0, %s51
      %s55 = sphi 0, %s54
      %s71 = sphi 0, %s55
      %s75 = sphi 0, %s75
      %s77 = sphi 0, %s75
      %s78 = sphi 0, %s77
      %s92 = sphi 0, %s78
      %s96 = sphi 0, %s96
      %s98 = sphi 0, %s96
      %s99 = sphi 0, %s98
      %s113 = sphi 0, %s99
      %s117 = sphi 0, %s117
      %s119 = sphi 0, %s117
      %s120 = sphi 0, %s119
      %s134 = sphi 0, %s120
      %s138 = sphi 0, %s138
      %s140 = sphi 0, %s138
      %s141 = sphi 0, %s140
      %s155 = sphi 0, %s141
      %s161 = sphi 0, %s163
      %s164 = sphi 0, %s161
      %s165 = sphi 0, %s164
      %s181 = sphi 0, %s165
    $region4: #{tpu_custom_call.1} parent=1 // loop_header_branch
      %18 = sbr.rel (%p16) target = $region8
    $region5: #{tpu_custom_call.1} parent=1 // loop_body
      %s20 = ssub.s32 %s15, 1
      %s21 = ssub.s32 %s15, 2
      %s22 = sadd.s32 %s15, 1
      %s23 = ssub.s32 %s15, %s22
      %p24 = scmp.eq.s32.totalorder %s23, 0
      %s26 = sadd.s32 %s25, 1
      %s27 = scalar_select %p24, %s25, %s26
      %p30 = pneg %p24
      %p31 = scmp.eq.s32.totalorder %s15, 1
      %p32 = por %p30, %p31
      %p33 = scmp.ne.s32.totalorder %s25, %s28
      %p34 = scmp.eq.s32.totalorder %s15, 0
      %p35 = por %p33, %p34
      %p36 = scmp.ne.s32.totalorder %s25, %s28
      %p37 = scmp.eq.s32.totalorder %s20, 1
      %p38 = por %p36, %p37
      %p39 = scmp.ne.s32.totalorder %s28, %s29
      %p40 = scmp.eq.s32.totalorder %s20, 0
      %p41 = por %p39, %p40
      %p42 = scmp.ne.s32.totalorder %s28, %s29
      %p43 = scmp.eq.s32.totalorder %s21, 1
      %p44 = por %p42, %p43
      %p46 = scmp.ne.s32.totalorder %s29, %s45
      %p47 = scmp.eq.s32.totalorder %s21, 0
      %p48 = por %p46, %p47
      %s49 = ssub.s32 %s15, %s22
      %p50 = scmp.eq.s32.totalorder %s49, 0
      %s52 = sadd.s32 %s51, 1
      %s53 = scalar_select %p50, %s51, %s52
      %p56 = pneg %p50
      %p57 = scmp.eq.s32.totalorder %s15, 1
      %p58 = por %p56, %p57
      %p59 = scmp.ne.s32.totalorder %s51, %s54
      %p60 = scmp.eq.s32.totalorder %s15, 0
      %p61 = por %p59, %p60
      %p62 = scmp.ne.s32.totalorder %s51, %s54
      %p63 = scmp.eq.s32.totalorder %s20, 1
      %p64 = por %p62, %p63
      %p65 = scmp.ne.s32.totalorder %s54, %s55
      %p66 = scmp.eq.s32.totalorder %s20, 0
      %p67 = por %p65, %p66
      %p68 = scmp.ne.s32.totalorder %s54, %s55
      %p69 = scmp.eq.s32.totalorder %s21, 1
      %p70 = por %p68, %p69
      %p72 = scmp.ne.s32.totalorder %s55, %s71
      %p73 = scmp.eq.s32.totalorder %s21, 0
      %p74 = por %p72, %p73
      %s76 = sadd.s32 %s75, 1
      %p79 = scmp.eq.s32.totalorder %s15, 1
      %p80 = scmp.ne.s32.totalorder %s75, %s77
      %p81 = scmp.eq.s32.totalorder %s15, 0
      %p82 = por %p80, %p81
      %p83 = scmp.ne.s32.totalorder %s75, %s77
      %p84 = scmp.eq.s32.totalorder %s20, 1
      %p85 = por %p83, %p84
      %p86 = scmp.ne.s32.totalorder %s77, %s78
      %p87 = scmp.eq.s32.totalorder %s20, 0
      %p88 = por %p86, %p87
      %p89 = scmp.ne.s32.totalorder %s77, %s78
      %p90 = scmp.eq.s32.totalorder %s21, 1
      %p91 = por %p89, %p90
      %p93 = scmp.ne.s32.totalorder %s78, %s92
      %p94 = scmp.eq.s32.totalorder %s21, 0
      %p95 = por %p93, %p94
      %s97 = sadd.s32 %s96, 1
      %p100 = scmp.eq.s32.totalorder %s15, 1
      %p101 = scmp.ne.s32.totalorder %s96, %s98
      %p102 = scmp.eq.s32.totalorder %s15, 0
      %p103 = por %p101, %p102
      %p104 = scmp.ne.s32.totalorder %s96, %s98
      %p105 = scmp.eq.s32.totalorder %s20, 1
      %p106 = por %p104, %p105
      %p107 = scmp.ne.s32.totalorder %s98, %s99
      %p108 = scmp.eq.s32.totalorder %s20, 0
      %p109 = por %p107, %p108
      %p110 = scmp.ne.s32.totalorder %s98, %s99
      %p111 = scmp.eq.s32.totalorder %s21, 1
      %p112 = por %p110, %p111
      %p114 = scmp.ne.s32.totalorder %s99, %s113
      %p115 = scmp.eq.s32.totalorder %s21, 0
      %p116 = por %p114, %p115
      %s118 = sadd.s32 %s117, 1
      %p121 = scmp.eq.s32.totalorder %s15, 1
      %p122 = scmp.ne.s32.totalorder %s117, %s119
      %p123 = scmp.eq.s32.totalorder %s15, 0
      %p124 = por %p122, %p123
      %p125 = scmp.ne.s32.totalorder %s117, %s119
      %p126 = scmp.eq.s32.totalorder %s20, 1
      %p127 = por %p125, %p126
      %p128 = scmp.ne.s32.totalorder %s119, %s120
      %p129 = scmp.eq.s32.totalorder %s20, 0
      %p130 = por %p128, %p129
      %p131 = scmp.ne.s32.totalorder %s119, %s120
      %p132 = scmp.eq.s32.totalorder %s21, 1
      %p133 = por %p131, %p132
      %p135 = scmp.ne.s32.totalorder %s120, %s134
      %p136 = scmp.eq.s32.totalorder %s21, 0
      %p137 = por %p135, %p136
      %s139 = sadd.s32 %s138, 1
      %p142 = scmp.eq.s32.totalorder %s15, 1
      %p143 = scmp.ne.s32.totalorder %s138, %s140
      %p144 = scmp.eq.s32.totalorder %s15, 0
      %p145 = por %p143, %p144
      %p146 = scmp.ne.s32.totalorder %s138, %s140
      %p147 = scmp.eq.s32.totalorder %s20, 1
      %p148 = por %p146, %p147
      %p149 = scmp.ne.s32.totalorder %s140, %s141
      %p150 = scmp.eq.s32.totalorder %s20, 0
      %p151 = por %p149, %p150
      %p152 = scmp.ne.s32.totalorder %s140, %s141
      %p153 = scmp.eq.s32.totalorder %s21, 1
      %p154 = por %p152, %p153
      %p156 = scmp.ne.s32.totalorder %s141, %s155
      %p157 = scmp.eq.s32.totalorder %s21, 0
      %p158 = por %p156, %p157
      %s159 = ssub.s32 %s15, %s22
      %p160 = scmp.eq.s32.totalorder %s159, 0
      %s162 = sadd.s32 %s161, 1
      %s163 = scalar_select %p160, %s161, %s162
      %p166 = pneg %p160
      %p167 = scmp.eq.s32.totalorder %s15, 1
      %p168 = por %p166, %p167
      %p169 = scmp.ne.s32.totalorder %s161, %s164
      %p170 = scmp.eq.s32.totalorder %s15, 0
      %p171 = por %p169, %p170
      %p172 = scmp.ne.s32.totalorder %s161, %s164
      %p173 = scmp.eq.s32.totalorder %s20, 1
      %p174 = por %p172, %p173
      %p175 = scmp.ne.s32.totalorder %s164, %s165
      %p176 = scmp.eq.s32.totalorder %s20, 0
      %p177 = por %p175, %p176
      %p178 = scmp.ne.s32.totalorder %s164, %s165
      %p179 = scmp.eq.s32.totalorder %s21, 1
      %p180 = por %p178, %p179
      %p182 = scmp.ne.s32.totalorder %s165, %s181
      %p183 = scmp.eq.s32.totalorder %s21, 0
      %p184 = por %p182, %p183
      %p185 = scmp.le.s32.totalorder 1, %s15
      %p186 = scmp.lt.s32.totalorder %s15, 3
      %p187 = pnand %p185, %p186
      %p188 = pneg %p187
      // Predicated region
      $region9: #{tpu_custom_call.1} parent=5 // pred_check
        _
      $region10: #{tpu_custom_call.1} parent=5 // pred_check_branch
        %190 = sbr.rel (%p187) target = $region12
      $region11: #{tpu_custom_call.1} parent=5 // pred_region
        %s191 = ssub.s32 %s15, 1
        // Predicated region
        $region13: #{tpu_custom_call.1} parent=11 // pred_check
          %p192 = pneg %p88
        $region14: #{tpu_custom_call.1} parent=11 // pred_check_branch
          %194 = sbr.rel (%p192) target = $region16
        $region15: #{tpu_custom_call.1} parent=11 // pred_region
          _
        $region16: #{tpu_custom_call.1} parent=11 // pred_fallthru
          _
        // Predicated region
        $region17: #{tpu_custom_call.1} parent=11 // pred_check
          %p195 = pneg %p109
        $region18: #{tpu_custom_call.1} parent=11 // pred_check_branch
          %197 = sbr.rel (%p195) target = $region20
        $region19: #{tpu_custom_call.1} parent=11 // pred_region
          _
        $region20: #{tpu_custom_call.1} parent=11 // pred_fallthru
          _
        // Predicated region
        $region21: #{tpu_custom_call.1} parent=11 // pred_check
          %p198 = pneg %p130
        $region22: #{tpu_custom_call.1} parent=11 // pred_check_branch
          %200 = sbr.rel (%p198) target = $region24
        $region23: #{tpu_custom_call.1} parent=11 // pred_region
          _
        $region24: #{tpu_custom_call.1} parent=11 // pred_fallthru
          _
        // Predicated region
        $region25: #{tpu_custom_call.1} parent=11 // pred_check
          %p201 = pneg %p151
        $region26: #{tpu_custom_call.1} parent=11 // pred_check_branch
          %203 = sbr.rel (%p201) target = $region28
        $region27: #{tpu_custom_call.1} parent=11 // pred_region
          _
        $region28: #{tpu_custom_call.1} parent=11 // pred_fallthru
          _
      $region12: #{tpu_custom_call.1} parent=5 // pred_fallthru
        _
      %p204 = scmp.lt.s32.totalorder %s15, 2
      // Predicated region
      $region29: #{tpu_custom_call.1} parent=5 // pred_check
        %p205 = pneg %p204
      $region30: #{tpu_custom_call.1} parent=5 // pred_check_branch
        %207 = sbr.rel (%p205) target = $region32
      $region31: #{tpu_custom_call.1} parent=5 // pred_region
        // Predicated region
        $region33: #{tpu_custom_call.1} parent=31 // pred_check
          %p208 = pneg %p35
        $region34: #{tpu_custom_call.1} parent=31 // pred_check_branch
          %210 = sbr.rel (%p208) target = $region36
        $region35: #{tpu_custom_call.1} parent=31 // pred_region
          %s211 = smul.u32 2, %s15
          %p212 = scmp.lt.s32.totalorder %s211, 3
          %s213 = scalar_select %p212, %s211, 3
          %s214 = smul.addr %s213, 4
          %s215 = scalar_lea.vmem %s0, %s214
          %s216 = smul.u32 2, %s15
        $region36: #{tpu_custom_call.1} parent=31 // pred_fallthru
          _
        // Predicated region
        $region37: #{tpu_custom_call.1} parent=31 // pred_check
          %p217 = pneg %p61
        $region38: #{tpu_custom_call.1} parent=31 // pred_check_branch
          %219 = sbr.rel (%p217) target = $region40
        $region39: #{tpu_custom_call.1} parent=31 // pred_region
          %s220 = smul.u32 2, %s15
          %p221 = scmp.lt.s32.totalorder %s220, 3
          %s222 = scalar_select %p221, %s220, 3
          %s223 = smul.addr %s222, 8
          %s224 = scalar_lea.vmem %s1, %s223
          %s225 = smul.u32 2, %s15
        $region40: #{tpu_custom_call.1} parent=31 // pred_fallthru
          _
      $region32: #{tpu_custom_call.1} parent=5 // pred_fallthru
        _
      %p226 = scmp.le.s32.totalorder 1, %s15
      %p227 = scmp.lt.s32.totalorder %s15, 3
      %p228 = pnand %p226, %p227
      %p229 = pneg %p228
      // Predicated region
      $region41: #{tpu_custom_call.1} parent=5 // pred_check
        _
      $region42: #{tpu_custom_call.1} parent=5 // pred_check_branch
        %231 = sbr.rel (%p228) target = $region44
      $region43: #{tpu_custom_call.1} parent=5 // pred_region
        %s232 = ssub.s32 %s15, 1
        %s233 = smul.u32 2, %s20
        %p234 = scmp.lt.s32.totalorder %s233, 3
        %s235 = scalar_select %p234, %s233, 3
        %s236 = smul.addr %s235, 4
        %s237 = scalar_lea.vmem %s0, %s236
        %p238 = pneg %p41
        %p239 = pneg %p38
        %s240 = smul.u32 2, %s20
        %p241 = scmp.lt.s32.totalorder %s240, 3
        %s242 = scalar_select %p241, %s240, 3
        %s243 = smul.addr %s242, 8
        %s244 = scalar_lea.vmem %s1, %s243
        %p245 = pneg %p67
        %p246 = pneg %p64
        %p247 = pneg %p88
        %p248 = pneg %p85
        %p249 = pneg %p109
        %p250 = pneg %p106
        %p251 = pneg %p130
        %p252 = pneg %p127
        %p253 = pneg %p151
        %p254 = pneg %p148
        %p255 = pneg %p177
        %p256 = pneg %p174
        %s257 = sand.u32 %s164, 1
        %s258 = scalar_lea.sflag [#allocation3], %s257
        %s259 = sand.u32 %s164, 1
        %s260 = smul.addr %s259, 16
        %s261 = scalar_lea.vmem [#allocation2], %s260
        %s262 = smul.u32 2, %s20
        %p263 = scmp.lt.s32.totalorder %s262, 3
        %s264 = scalar_select %p263, %s262, 3
        %s265 = smul.addr %s264, 4
        %s266 = scalar_lea.vmem %s0, %s265
        %s267 = smul.u32 2, %s20
        %s268 = smul.u32 2, %s20
        %p269 = scmp.lt.s32.totalorder %s268, 3
        %s270 = scalar_select %p269, %s268, 3
        %s271 = smul.addr %s270, 8
        %s272 = scalar_lea.vmem %s1, %s271
        %s273 = smul.u32 2, %s20
        %s274 = smul.u32 2, %s20
        %v275 = vld [vmem:[%s2] sm:$0xff]
        %v276 = vld [vmem:[%s2 + $0x8] sm:$0xff]
        %v277 = vld [vmem:[%s2 + $0x10] sm:$0xff]
        %v278 = vld [vmem:[%s2 + $0x18] sm:$0xff]
        %v279 = vld [vmem:[%s2 + $0x20] sm:$0xff]
        %v280 = vld [vmem:[%s2 + $0x28] sm:$0xff]
        %v281 = vld [vmem:[%s2 + $0x30] sm:$0xff]
        %v282 = vld [vmem:[%s2 + $0x38] sm:$0xff]
        %v283 = vld [vmem:[%s266] sm:$0xff]
        %v284 = vld [vmem:[%s3] sm:$0xff]
        %v285 = vld [vmem:[%s3 + $0x8] sm:$0xff]
        %v286 = vld [vmem:[%s3 + $0x10] sm:$0xff]
        %v287 = vld [vmem:[%s3 + $0x18] sm:$0xff]
        %v288 = vld [vmem:[%s3 + $0x20] sm:$0xff]
        %v289 = vld [vmem:[%s3 + $0x28] sm:$0xff]
        %v290 = vld [vmem:[%s3 + $0x30] sm:$0xff]
        %v291 = vld [vmem:[%s3 + $0x38] sm:$0xff]
        %293 = vset.pattern.permute.xlu0 0
        %294 = vperm.xlu0 %293, %v284
        %v295 = vpop.permute.xlu0 %294
        %298 = vset.pattern.permute.xlu0 0
        %299 = vperm.xlu0 %298, %v285
        %v300 = vpop.permute.xlu0 %299
        %303 = vset.pattern.permute.xlu0 0
        %304 = vperm.xlu0 %303, %v286
        %v305 = vpop.permute.xlu0 %304
        %308 = vset.pattern.permute.xlu0 0
        %309 = vperm.xlu0 %308, %v287
        %v310 = vpop.permute.xlu0 %309
        %313 = vset.pattern.permute.xlu0 0
        %314 = vperm.xlu0 %313, %v288
        %v315 = vpop.permute.xlu0 %314
        %318 = vset.pattern.permute.xlu0 0
        %319 = vperm.xlu0 %318, %v289
        %v320 = vpop.permute.xlu0 %319
        %323 = vset.pattern.permute.xlu0 0
        %324 = vperm.xlu0 %323, %v290
        %v325 = vpop.permute.xlu0 %324
        %328 = vset.pattern.permute.xlu0 0
        %329 = vperm.xlu0 %328, %v291
        %v330 = vpop.permute.xlu0 %329
        %v333 = vcombine.high %v283, %v283
        %vm334 = vcmask 31744
        %v336 = vsel %vm334, %v275, 0
        %v339 = vsel %vm334, %v276, 0
        %v342 = vsel %vm334, %v277, 0
        %v345 = vsel %vm334, %v278, 0
        %v348 = vsel %vm334, %v279, 0
        %v351 = vsel %vm334, %v280, 0
        %v354 = vsel %vm334, %v281, 0
        %v357 = vsel %vm334, %v282, 0
        %vm359 = vcmask 1043456
        %v360 = vsel %vm359, %v283, 0
        %v362 = vsel %vm359, %v333, 0
        %364 = vmatprep.subr.mxu0 0.0
        %365 = vmatpush1.msra.mxu0 0.0
        %366 = vmatprep.subr.mxu0 0.0
        %367 = vmatpush1.msra.mxu0 0.0
        %368 = vmatprep.subr.mxu0 0.0
        %369 = vmatpush1.msra.mxu0 0.0
        %370 = vmatprep.subr.mxu0 0.0
        %371 = vmatpush1.msra.mxu0 0.0
        %372 = vmatprep.subr.mxu0 0.0
        %373 = vmatpush1.msra.mxu0 0.0
        %374 = vmatprep.subr.mxu0 0.0
        %375 = vmatpush1.msra.mxu0 0.0
        %376 = vmatprep.subr.mxu0 0.0
        %377 = vmatpush1.msra.mxu0 0.0
        %378 = vmatprep.subr.mxu0 0.0
        %379 = vmatpush1.msra.mxu0 0.0
        %380 = vmatprep.subr.mxu0 0.0
        %381 = vmatpush1.msra.mxu0 0.0
        %382 = vmatprep.subr.mxu0 0.0
        %383 = vmatpush1.msra.mxu0 0.0
        %384 = vmatprep.subr.mxu0 0.0
        %385 = vmatpush1.msra.mxu0 0.0
        %386 = vmatprep.subr.mxu0 0.0
        %387 = vmatpush1.msra.mxu0 0.0
        %388 = vmatprep.subr.mxu0 0.0
        %389 = vmatpush1.msra.mxu0 0.0
        %390 = vmatprep.subr.mxu0 0.0
        %391 = vmatpush1.msra.mxu0 0.0
        %392 = vmatprep.subr.mxu0 0.0
        %393 = vmatpush1.msra.mxu0 0.0
        %394 = vmatprep.subr.mxu0 %v362
        %395 = vmatpush1.msra.mxu0 %v360
        %396 = vmatprep.subr.mxu0 0.0
        %397 = vmatpush2.msra.mxu0 0.0
        %398 = vmatprep.subr.mxu0 0.0
        %399 = vmatpush2.msra.mxu0 0.0
        %400 = vmatprep.subr.mxu0 0.0
        %401 = vmatpush2.msra.mxu0 0.0
        %402 = vmatprep.subr.mxu0 0.0
        %403 = vmatpush2.msra.mxu0 0.0
        %404 = vmatprep.subr.mxu0 0.0
        %405 = vmatpush2.msra.mxu0 0.0
        %406 = vmatprep.subr.mxu0 0.0
        %407 = vmatpush2.msra.mxu0 0.0
        %408 = vmatprep.subr.mxu0 0.0
        %409 = vmatpush2.msra.mxu0 0.0
        %410 = vmatprep.subr.mxu0 0.0
        %411 = vmatpush2.msra.mxu0 0.0
        %412 = vmatprep.subr.mxu0 0.0
        %413 = vmatpush2.msra.mxu0 0.0
        %414 = vmatprep.subr.mxu0 0.0
        %415 = vmatpush2.msra.mxu0 0.0
        %416 = vmatprep.subr.mxu0 0.0
        %417 = vmatpush2.msra.mxu0 0.0
        %418 = vmatprep.subr.mxu0 0.0
        %419 = vmatpush2.msra.mxu0 0.0
        %420 = vmatprep.subr.mxu0 0.0
        %421 = vmatpush2.msra.mxu0 0.0
        %422 = vmatprep.subr.mxu0 0.0
        %423 = vmatpush2.msra.mxu0 0.0
        %424 = vmatprep.subr.mxu0 0.0
        %425 = vmatpush2.msra.mxu0 0.0
        %426 = vmatprep.subr.mxu0 0.0
        %427 = vmatpush2.msra.mxu0 0.0
        %428 = vmatprep.mubr.f32.mxu0 0.0
        %429 = vmatmul.mubr.f32.gmra.mxu0 %v336
        %v430 = vpop.f32.mrf.mxu0
        %v431 = vadd.f32 %v295, %v430
        %v432 = vpop.f32.mrf.mxu0
        %v433 = vadd.f32 %v295, %v432
        %434 = vmatprep.mubr.f32.mxu0 0.0
        %435 = vmatmul.mubr.f32.gmra.mxu0 %v339
        %v436 = vpop.f32.mrf.mxu0
        %v437 = vadd.f32 %v300, %v436
        %v438 = vpop.f32.mrf.mxu0
        %v439 = vadd.f32 %v300, %v438
        %440 = vmatprep.mubr.f32.mxu0 0.0
        %441 = vmatmul.mubr.f32.gmra.mxu0 %v342
        %v442 = vpop.f32.mrf.mxu0
        %v443 = vadd.f32 %v305, %v442
        %v444 = vpop.f32.mrf.mxu0
        %v445 = vadd.f32 %v305, %v444
        %446 = vmatprep.mubr.f32.mxu0 0.0
        %447 = vmatmul.mubr.f32.gmra.mxu0 %v345
        %v448 = vpop.f32.mrf.mxu0
        %v449 = vadd.f32 %v310, %v448
        %v450 = vpop.f32.mrf.mxu0
        %v451 = vadd.f32 %v310, %v450
        %452 = vmatprep.mubr.f32.mxu0 0.0
        %453 = vmatmul.mubr.f32.gmra.mxu0 %v348
        %v454 = vpop.f32.mrf.mxu0
        %v455 = vadd.f32 %v315, %v454
        %v456 = vpop.f32.mrf.mxu0
        %v457 = vadd.f32 %v315, %v456
        %458 = vmatprep.mubr.f32.mxu0 0.0
        %459 = vmatmul.mubr.f32.gmra.mxu0 %v351
        %v460 = vpop.f32.mrf.mxu0
        %v461 = vadd.f32 %v320, %v460
        %v462 = vpop.f32.mrf.mxu0
        %v463 = vadd.f32 %v320, %v462
        %464 = vmatprep.mubr.f32.mxu0 0.0
        %465 = vmatmul.mubr.f32.gmra.mxu0 %v354
        %v466 = vpop.f32.mrf.mxu0
        %v467 = vadd.f32 %v325, %v466
        %v468 = vpop.f32.mrf.mxu0
        %v469 = vadd.f32 %v325, %v468
        %470 = vmatprep.mubr.f32.mxu0 0.0
        %471 = vmatmul.mubr.f32.gmra.mxu0 %v357
        %v472 = vpop.f32.mrf.mxu0
        %v473 = vadd.f32 %v330, %v472
        %v474 = vpop.f32.mrf.mxu0
        %v475 = vadd.f32 %v330, %v474
        %476 = vdwg.mxu0
        %v477 = vmax.f32 %v431, 0.0
        %v478 = vmax.f32 %v433, 0.0
        %v479 = vmax.f32 %v437, 0.0
        %v480 = vmax.f32 %v439, 0.0
        %v481 = vmax.f32 %v443, 0.0
        %v482 = vmax.f32 %v445, 0.0
        %v483 = vmax.f32 %v449, 0.0
        %v484 = vmax.f32 %v451, 0.0
        %v485 = vmax.f32 %v455, 0.0
        %v486 = vmax.f32 %v457, 0.0
        %v487 = vmax.f32 %v461, 0.0
        %v488 = vmax.f32 %v463, 0.0
        %v489 = vmax.f32 %v467, 0.0
        %v490 = vmax.f32 %v469, 0.0
        %v491 = vmax.f32 %v473, 0.0
        %v492 = vmax.f32 %v475, 0.0
        %v493 = vld [vmem:[%s4] sm:$0x3f]
        %v494 = vld [vmem:[%s5] sm:$0x3f]
        %496 = vset.pattern.permute.xlu0 0
        %497 = vperm.xlu0 %496, %v494
        %v498 = vpop.permute.xlu0 %497
        %vm500 = vcmask 523264
        %v502 = vsel %vm500, %v493, 0
        %504 = vmatprep.subr.mxu0 0.0
        %505 = vmatpush1.msra.mxu0 0.0
        %506 = vmatprep.subr.mxu0 0.0
        %507 = vmatpush1.msra.mxu0 0.0
        %508 = vmatprep.subr.mxu0 0.0
        %509 = vmatpush1.msra.mxu0 0.0
        %510 = vmatprep.subr.mxu0 0.0
        %511 = vmatpush1.msra.mxu0 0.0
        %512 = vmatprep.subr.mxu0 0.0
        %513 = vmatpush1.msra.mxu0 0.0
        %514 = vmatprep.subr.mxu0 0.0
        %515 = vmatpush1.msra.mxu0 0.0
        %516 = vmatprep.subr.mxu0 0.0
        %517 = vmatpush1.msra.mxu0 0.0
        %518 = vmatprep.subr.mxu0 0.0
        %519 = vmatpush1.msra.mxu0 0.0
        %520 = vmatprep.subr.mxu0 %v492
        %521 = vmatpush1.msra.mxu0 %v491
        %522 = vmatprep.subr.mxu0 %v490
        %523 = vmatpush1.msra.mxu0 %v489
        %524 = vmatprep.subr.mxu0 %v488
        %525 = vmatpush1.msra.mxu0 %v487
        %526 = vmatprep.subr.mxu0 %v486
        %527 = vmatpush1.msra.mxu0 %v485
        %528 = vmatprep.subr.mxu0 %v484
        %529 = vmatpush1.msra.mxu0 %v483
        %530 = vmatprep.subr.mxu0 %v482
        %531 = vmatpush1.msra.mxu0 %v481
        %532 = vmatprep.subr.mxu0 %v480
        %533 = vmatpush1.msra.mxu0 %v479
        %534 = vmatprep.subr.mxu0 %v478
        %535 = vmatpush1.msra.mxu0 %v477
        %536 = vmatprep.subr.mxu0 0.0
        %537 = vmatpush2.msra.mxu0 0.0
        %538 = vmatprep.subr.mxu0 0.0
        %539 = vmatpush2.msra.mxu0 0.0
        %540 = vmatprep.subr.mxu0 0.0
        %541 = vmatpush2.msra.mxu0 0.0
        %542 = vmatprep.subr.mxu0 0.0
        %543 = vmatpush2.msra.mxu0 0.0
        %544 = vmatprep.subr.mxu0 0.0
        %545 = vmatpush2.msra.mxu0 0.0
        %546 = vmatprep.subr.mxu0 0.0
        %547 = vmatpush2.msra.mxu0 0.0
        %548 = vmatprep.subr.mxu0 0.0
        %549 = vmatpush2.msra.mxu0 0.0
        %550 = vmatprep.subr.mxu0 0.0
        %551 = vmatpush2.msra.mxu0 0.0
        %552 = vmatprep.subr.mxu0 0.0
        %553 = vmatpush2.msra.mxu0 0.0
        %554 = vmatprep.subr.mxu0 0.0
        %555 = vmatpush2.msra.mxu0 0.0
        %556 = vmatprep.subr.mxu0 0.0
        %557 = vmatpush2.msra.mxu0 0.0
        %558 = vmatprep.subr.mxu0 0.0
        %559 = vmatpush2.msra.mxu0 0.0
        %560 = vmatprep.subr.mxu0 0.0
        %561 = vmatpush2.msra.mxu0 0.0
        %562 = vmatprep.subr.mxu0 0.0
        %563 = vmatpush2.msra.mxu0 0.0
        %564 = vmatprep.subr.mxu0 0.0
        %565 = vmatpush2.msra.mxu0 0.0
        %566 = vmatprep.subr.mxu0 0.0
        %567 = vmatpush2.msra.mxu0 0.0
        %568 = vmatprep.mubr.f32.mxu0 0.0
        %569 = vmatmul.mubr.f32.gmra.mxu0 %v502
        %v570 = vpop.f32.mrf.mxu0
        %v571 = vadd.f32 %v498, %v570
        %v572 = vpop.f32.mrf.mxu0
        %v573 = vadd.f32 %v498, %v572
        %574 = vdwg.mxu0
        %v575 = vld [vmem:[%s272] sm:$0x3f]
        %v576 = vld [vmem:[%s272 + $0x8] sm:$0x3f]
        %v577 = vmul.f32 %v571, %v575
        %v578 = vmul.f32 %v573, %v576
        %579 = vst [vmem:[%s261] sm:$0x3f] %v577
        %580 = vst [vmem:[%s261 + $0x8] sm:$0x3f] %v578
        %s581 = sand.u32 %s164, 1
        %s582 = scalar_lea.sflag [#allocation3], %s581
        %s583 = sand.u32 %s164, 1
        %s584 = smul.addr %s583, 16
        %s585 = scalar_lea.vmem [#allocation2], %s584
        // Predicated region
        $region45: #{tpu_custom_call.1} parent=43 // pred_check
          %p586 = pneg %p174
        $region46: #{tpu_custom_call.1} parent=43 // pred_check_branch
          %588 = sbr.rel (%p586) target = $region48
        $region47: #{tpu_custom_call.1} parent=43 // pred_region
          %s589 = smul.u32 2, %s20
          %s591 = ssub.s32 256, 256
          %592 = vsyncadd %s582, %s591
          %s593 = smul.addr %s589, 128
          %s594 = scalar_lea.hbm %s6, %s593
          %s596 = sshll.u32 %s585, 4
          %s597 = int_to_ptr.vmem [resolvable:$true] %s596
          %599 = dma.vmem_to_hbm [thread:$0]  %s597, 256, %s594, %s582
        $region48: #{tpu_custom_call.1} parent=43 // pred_fallthru
          _
      $region44: #{tpu_custom_call.1} parent=5 // pred_fallthru
        _
      %p600 = scmp.le.s32.totalorder 2, %s15
      // Predicated region
      $region49: #{tpu_custom_call.1} parent=5 // pred_check
        %p601 = pneg %p600
      $region50: #{tpu_custom_call.1} parent=5 // pred_check_branch
        %603 = sbr.rel (%p601) target = $region52
      $region51: #{tpu_custom_call.1} parent=5 // pred_region
        %s604 = ssub.s32 %s15, 2
        // Predicated region
        $region53: #{tpu_custom_call.1} parent=51 // pred_check
          %p605 = pneg %p180
        $region54: #{tpu_custom_call.1} parent=51 // pred_check_branch
          %607 = sbr.rel (%p605) target = $region56
        $region55: #{tpu_custom_call.1} parent=51 // pred_region
          %s608 = sand.u32 %s165, 1
          %s609 = scalar_lea.sflag [#allocation3], %s608
          %s610 = sand.u32 %s165, 1
          %s611 = smul.addr %s610, 16
          %s612 = scalar_lea.vmem [#allocation2], %s611
          %613 = dma.done %s609, 256
        $region56: #{tpu_custom_call.1} parent=51 // pred_fallthru
          _
      $region52: #{tpu_custom_call.1} parent=5 // pred_fallthru
        _
    $region6: #{tpu_custom_call.1} parent=1 // loop_footer
      %s19 = sadd.s32 1, %s15
    $region7: #{tpu_custom_call.1} parent=1 // loop_footer_branch
      %14 = sbr.rel target = $region3
    $region8: #{tpu_custom_call.1} parent=1 // loop_exit
      _
    %614 = vsyncpa [#allocation3], 1
    %s615 = scalar_lea.sflag [#allocation3], 1
    %616 = vsyncpa %s615, 1

</llo_original>
